<compile_context>
chip_gen: v6e
topology: v6e:2x2x1
jax: 0.10.0
libtpu: 0.0.40
codegen_flags: <defaults>
</compile_context>

<pallas_src>
import functools

import jax
import jax.numpy as jnp
from jax.experimental import pallas as pl
from jax.experimental.pallas import tpu as pltpu


def encoder_rnn_kernel(x_ref, h0_ref, wih_ref, whh_ref, bih_ref, bhh_ref,
                       out_ref, hout_ref, h_scratch, gi_scratch,
                       *, n_layers, hp, ts, seq_len):
    """One chunk of TS timesteps of EncoderRNN.forward."""
    c = pl.program_id(0)

    # Initialize the carried hidden state on the first chunk.
    @pl.when(c == 0)
    def _():
        h_scratch[...] = h0_ref[...]

    wih = wih_ref[...]             # (Hp, 3Hp) bf16, gates blocked [r | z | n]
    whh = whh_ref[...]             # (Hp, 3Hp) bf16
    bih = bih_ref[...]             # (1, 3Hp)  f32
    bhh = bhh_ref[...]             # (1, 3Hp)  f32

    # Hoisted input-side matmul for the whole chunk (M=TS fills the MXU):
    # GI = X @ W_ih + b_ih, valid for the first GRU application of every step.
    gi_scratch[...] = (
        jnp.dot(x_ref[...], wih, preferred_element_type=jnp.float32) + bih)

    base = c * ts

    def step(t, h):
        # --- first GRU application: gi precomputed, only gh on serial path ---
        gi = gi_scratch[pl.ds(t, 1), :]                       # (1, 3Hp) f32
        gh = jnp.dot(h.astype(whh.dtype), whh,
                     preferred_element_type=jnp.float32) + bhh
        r = jax.nn.sigmoid(gi[:, 0:hp] + gh[:, 0:hp])
        z = jax.nn.sigmoid(gi[:, hp:2 * hp] + gh[:, hp:2 * hp])
        n = jnp.tanh(gi[:, 2 * hp:3 * hp] + r * gh[:, 2 * hp:3 * hp])
        h_new = (1.0 - z) * n + z * h
        out = h_new
        # --- extra applications of the SAME GRU (tutorial n_layers > 1) -----
        for _ in range(n_layers - 1):
            gi2 = jnp.dot(out.astype(wih.dtype), wih,
                          preferred_element_type=jnp.float32) + bih
            gh2 = jnp.dot(h_new.astype(whh.dtype), whh,
                          preferred_element_type=jnp.float32) + bhh
            r2 = jax.nn.sigmoid(gi2[:, 0:hp] + gh2[:, 0:hp])
            z2 = jax.nn.sigmoid(gi2[:, hp:2 * hp] + gh2[:, hp:2 * hp])
            n2 = jnp.tanh(gi2[:, 2 * hp:3 * hp] + r2 * gh2[:, 2 * hp:3 * hp])
            h_new = (1.0 - z2) * n2 + z2 * h_new
            out = h_new
        # Write this step's output row into the chunk's VMEM output tile
        # (full dense (TS, Hp) tile is written back to HBM once per chunk).
        out_ref[pl.ds(t, 1), :] = out.astype(out_ref.dtype)
        # Padded (t >= seq_len) steps must not perturb the carried hidden.
        valid = (base + t) < seq_len
        return jnp.where(valid, h_new, h)

    h_final = jax.lax.fori_loop(0, ts, step, h_scratch[...])
    h_scratch[...] = h_final

    # Store the final hidden state only once, on the last chunk.
    @pl.when(c == pl.num_programs(0) - 1)
    def _():
        hout_ref[...] = h_final.astype(hout_ref.dtype)


def _round_up(x, m):
    return (x + m - 1) // m * m


def _pad_gated_weight(w, h, hp):
    """(H, 3H) gate-blocked weight -> (Hp, 3Hp), zero-padding each gate block."""
    gates = jnp.split(w, 3, axis=1)                           # 3 x (H, H)
    gates = [jnp.pad(g, ((0, hp - h), (0, hp - h))) for g in gates]
    return jnp.concatenate(gates, axis=1)                     # (Hp, 3Hp)


def _pad_gated_bias(b, h, hp):
    """(1, 3H) gate-blocked bias -> (1, 3Hp)."""
    gates = jnp.split(b, 3, axis=1)                           # 3 x (1, H)
    gates = [jnp.pad(g, ((0, 0), (0, hp - h))) for g in gates]
    return jnp.concatenate(gates, axis=1)                     # (1, 3Hp)


def encoder_rnn_forward(token_ids, hidden, params, *, n_layers=1,
                        chunk_steps=32, weight_dtype=jnp.bfloat16):
    """Run EncoderRNN.forward over a token sequence in a single fused kernel.

    token_ids : int32 token id(s), scalar or shape (T,)
    hidden    : (1, 1, H) float32 initial hidden state (initHidden())
    returns   : (outputs, hidden) with shapes (T, 1, H) and (1, 1, H);
                for T == 1 this matches the PyTorch forward exactly.
    """
    emb = params["embedding"]          # (V, H)
    wih = params["w_ih"]               # (H, 3H)  gates [r | z | n]
    whh = params["w_hh"]               # (H, 3H)
    bih = params["b_ih"]               # (1, 3H)
    bhh = params["b_hh"]               # (1, 3H)
    V, H = emb.shape
    Hp = _round_up(H, 128)             # lane-dense hidden width

    idx = jnp.asarray(token_ids, dtype=jnp.int32).reshape(-1)
    # Clamp OOB token ids (PyTorch would raise; documented guard, no HW check).
    idx = jnp.clip(idx, 0, V - 1)
    T = idx.shape[0]

    # Chunking: TS timesteps per grid step, sublane-aligned (multiple of 8).
    TS = _round_up(min(chunk_steps, max(T, 1)), 8)
    num_chunks = pl.cdiv(T, TS)
    Tp = num_chunks * TS

    # Lane-dense zero padding (exact: padded lanes see zero weights/biases and
    # stay identically 0 through the recurrence). Weights/embedding in bf16.
    emb_p = jnp.pad(emb, ((0, 0), (0, Hp - H))).astype(weight_dtype)
    h0_p = jnp.pad(hidden.reshape(1, H).astype(jnp.float32),
                   ((0, 0), (0, Hp - H)))
    wih_p = _pad_gated_weight(wih, H, Hp).astype(weight_dtype)
    whh_p = _pad_gated_weight(whh, H, Hp).astype(weight_dtype)
    bih_p = _pad_gated_bias(bih, H, Hp).astype(jnp.float32)
    bhh_p = _pad_gated_bias(bhh, H, Hp).astype(jnp.float32)

    # Pre-gather embeddings: one XLA HBM gather -> contiguous (Tp, Hp) slab.
    x = jnp.take(emb_p, idx, axis=0)                    # (T, Hp) bf16
    x = jnp.pad(x, ((0, Tp - T), (0, 0)))               # (Tp, Hp)

    kernel = functools.partial(encoder_rnn_kernel, n_layers=n_layers,
                               hp=Hp, ts=TS, seq_len=T)

    wbytes = jnp.dtype(weight_dtype).itemsize
    # Rough VMEM footprint (weights double-buffered by the pipeline).
    vmem_bytes = (2 * (2 * Hp * 3 * Hp * wbytes)      # w_ih/w_hh, 2 buffers
                  + 2 * (2 * 3 * Hp * 4)              # biases
                  + 2 * TS * Hp * (wbytes + 4)        # x + out blocks, 2 bufs
                  + TS * 3 * Hp * 4                   # gi scratch
                  + 4 * Hp * 4)                       # h0 / hout / h scratch
    vmem_limit = int(min(max(4 * vmem_bytes, 8 << 20), 48 << 20))

    cost = pl.CostEstimate(
        flops=int(T * n_layers * 12 * Hp * Hp + T * n_layers * 12 * Hp),
        transcendentals=int(T * n_layers * 3 * Hp),
        bytes_accessed=int(2 * Hp * 3 * Hp * wbytes + 2 * 3 * Hp * 4
                           + Tp * Hp * (wbytes + 4) + 2 * Hp * 4),
    )

    out_pad, h_pad = pl.pallas_call(
        kernel,
        out_shape=(
            jax.ShapeDtypeStruct((Tp, Hp), jnp.float32),     # per-step outputs
            jax.ShapeDtypeStruct((1, Hp), jnp.float32),      # final hidden
        ),
        grid_spec=pltpu.PrefetchScalarGridSpec(
            num_scalar_prefetch=0,
            grid=(num_chunks,),
            in_specs=[
                # Pre-gathered embedding chunk (sublane/lane dense tile).
                pl.BlockSpec((TS, Hp), lambda c: (c, 0)),
                # h0: constant index -> DMA'd once, VMEM-resident.
                pl.BlockSpec((1, Hp), lambda c: (0, 0)),
                # Weights / biases: constant index -> resident for the run.
                pl.BlockSpec((Hp, 3 * Hp), lambda c: (0, 0)),    # w_ih
                pl.BlockSpec((Hp, 3 * Hp), lambda c: (0, 0)),    # w_hh
                pl.BlockSpec((1, 3 * Hp), lambda c: (0, 0)),     # b_ih
                pl.BlockSpec((1, 3 * Hp), lambda c: (0, 0)),     # b_hh
            ],
            out_specs=[
                pl.BlockSpec((TS, Hp), lambda c: (c, 0)),        # outputs
                pl.BlockSpec((1, Hp), lambda c: (0, 0)),         # final hidden
            ],
            scratch_shapes=[
                pltpu.VMEM((1, Hp), jnp.float32),        # carried hidden state
                pltpu.VMEM((TS, 3 * Hp), jnp.float32),   # hoisted GI per chunk
            ],
        ),
        compiler_params=pltpu.CompilerParams(
            # Chunk axis carries a serial dependence through the hidden state.
            dimension_semantics=("arbitrary",),
            vmem_limit_bytes=vmem_limit),
        cost_estimate=cost,
    )(x, h0_p, wih_p, whh_p, bih_p, bhh_p)

    outputs = out_pad[:T, :H].reshape(T, 1, H)
    hidden_new = h_pad[:, :H].reshape(1, 1, H)
    return outputs, hidden_new


def init_params(key, input_size, hidden_size):
    """Deterministic synthetic parameters (shapes match nn.Embedding + nn.GRU)."""
    kE, k1, k2, k3, k4 = jax.random.split(key, 5)
    s = 1.0 / jnp.sqrt(hidden_size)
    return {
        "embedding": jax.random.normal(kE, (input_size, hidden_size),
                                       dtype=jnp.float32),
        "w_ih": jax.random.uniform(k1, (hidden_size, 3 * hidden_size),
                                   minval=-s, maxval=s, dtype=jnp.float32),
        "w_hh": jax.random.uniform(k2, (hidden_size, 3 * hidden_size),
                                   minval=-s, maxval=s, dtype=jnp.float32),
        "b_ih": jax.random.uniform(k3, (1, 3 * hidden_size),
                                   minval=-s, maxval=s, dtype=jnp.float32),
        "b_hh": jax.random.uniform(k4, (1, 3 * hidden_size),
                                   minval=-s, maxval=s, dtype=jnp.float32),
    }


def _reference_forward(token_ids, hidden, params, *, n_layers=1,
                       weight_dtype=jnp.bfloat16):
    """Pure-JAX reference mirroring the kernel's bf16-weight / f32-math recipe."""
    H = params["embedding"].shape[1]
    emb = params["embedding"].astype(weight_dtype)
    wih = params["w_ih"].astype(weight_dtype)
    whh = params["w_hh"].astype(weight_dtype)
    bih = params["b_ih"].astype(jnp.float32)
    bhh = params["b_hh"].astype(jnp.float32)
    h = hidden.reshape(1, H).astype(jnp.float32)
    outs = []
    for tok in jnp.asarray(token_ids).reshape(-1):
        out = emb[tok].reshape(1, H).astype(jnp.float32)
        for _ in range(n_layers):
            gi = jnp.dot(out.astype(weight_dtype), wih,
                         preferred_element_type=jnp.float32) + bih
            gh = jnp.dot(h.astype(weight_dtype), whh,
                         preferred_element_type=jnp.float32) + bhh
            r = jax.nn.sigmoid(gi[:, 0:H] + gh[:, 0:H])
            z = jax.nn.sigmoid(gi[:, H:2 * H] + gh[:, H:2 * H])
            n = jnp.tanh(gi[:, 2 * H:] + r * gh[:, 2 * H:])
            h = (1.0 - z) * n + z * h
            out = h
        outs.append(out)
    T = len(outs)
    return jnp.stack(outs).reshape(T, 1, H), h.reshape(1, 1, H)


if __name__ == "__main__":
    input_size = 64      # vocab size
    hidden_size = 32
    n_layers = 1
    seq_len = 8

    key = jax.random.PRNGKey(0)
    params = init_params(key, input_size, hidden_size)

    tokens = jax.random.randint(jax.random.fold_in(key, 123), (seq_len,),
                                0, input_size, dtype=jnp.int32)
    hidden0 = jnp.zeros((1, 1, hidden_size), jnp.float32)   # initHidden()

    outputs, hidden = encoder_rnn_forward(tokens, hidden0, params,
                                          n_layers=n_layers)
    jax.block_until_ready((outputs, hidden))

    ref_out, ref_hid = _reference_forward(tokens, hidden0, params,
                                          n_layers=n_layers)
    assert outputs.shape == (seq_len, 1, hidden_size)
    assert hidden.shape == (1, 1, hidden_size)
    assert jnp.allclose(outputs, ref_out, atol=1e-3, rtol=1e-3), \
        float(jnp.max(jnp.abs(outputs - ref_out)))
    assert jnp.allclose(hidden, ref_hid, atol=1e-3, rtol=1e-3), \
        float(jnp.max(jnp.abs(hidden - ref_hid)))

    print("KERNEL_OK")
</pallas_src>

<mosaic_0001>
module attributes {stable_mosaic.version = 11 : i64} {
  func.func @encoder_rnn_kernel(%arg0: i32, %arg1: memref<8x128xbf16, #tpu.memory_space<vmem>>, %arg2: memref<1x128xf32, #tpu.memory_space<vmem>>, %arg3: memref<128x384xbf16, #tpu.memory_space<vmem>>, %arg4: memref<128x384xbf16, #tpu.memory_space<vmem>>, %arg5: memref<1x384xf32, #tpu.memory_space<vmem>>, %arg6: memref<1x384xf32, #tpu.memory_space<vmem>>, %arg7: memref<8x128xf32, #tpu.memory_space<vmem>>, %arg8: memref<1x128xf32, #tpu.memory_space<vmem>>, %arg9: memref<1x128xf32, #tpu.memory_space<vmem>>, %arg10: memref<8x384xf32, #tpu.memory_space<vmem>>) attributes {dimension_semantics = [#tpu.dimension_semantics<arbitrary>], iteration_bounds = array<i64: 1>, scalar_prefetch = 0 : i64, scratch_operands = 2 : i64, tpu.core_type = #tpu.core_type<tc>, window_params = [{transform_indices = @transform_0, window_bounds = array<i64: 8, 128>}, {pipeline_mode = #tpu.pipeline_mode<synchronous>, transform_indices = @transform_1, window_bounds = array<i64: 1, 128>}, {pipeline_mode = #tpu.pipeline_mode<synchronous>, transform_indices = @transform_2, window_bounds = array<i64: 128, 384>}, {pipeline_mode = #tpu.pipeline_mode<synchronous>, transform_indices = @transform_3, window_bounds = array<i64: 128, 384>}, {pipeline_mode = #tpu.pipeline_mode<synchronous>, transform_indices = @transform_4, window_bounds = array<i64: 1, 384>}, {pipeline_mode = #tpu.pipeline_mode<synchronous>, transform_indices = @transform_5, window_bounds = array<i64: 1, 384>}, {transform_indices = @transform_6, window_bounds = array<i64: 8, 128>}, {pipeline_mode = #tpu.pipeline_mode<synchronous>, transform_indices = @transform_7, window_bounds = array<i64: 1, 128>}]} {
    %c0_i32 = arith.constant 0 : i32
    %0 = arith.cmpi eq, %arg0, %c0_i32 : i32
    %1 = arith.extui %0 : i1 to i32
    %c0_i32_0 = arith.constant 0 : i32
    %2 = arith.cmpi ne, %1, %c0_i32_0 : i32
    scf.if %2 {
      %c0_21 = arith.constant 0 : index
      %c0_22 = arith.constant 0 : index
      %20 = vector.load %arg2[%c0_21, %c0_22] : memref<1x128xf32, #tpu.memory_space<vmem>>, vector<1x128xf32>
      %c0_23 = arith.constant 0 : index
      %c0_24 = arith.constant 0 : index
      %21 = vector.load %arg9[%c0_23, %c0_24] : memref<1x128xf32, #tpu.memory_space<vmem>>, vector<1x128xf32>
      tpu.vector_store %arg9[%c0_23, %c0_24], %20 {strides = array<i32>} : memref<1x128xf32, #tpu.memory_space<vmem>>, vector<1x128xf32>,
    } else {
    }
    %c0 = arith.constant 0 : index
    %c0_1 = arith.constant 0 : index
    %3 = vector.load %arg3[%c0, %c0_1] : memref<128x384xbf16, #tpu.memory_space<vmem>>, vector<128x384xbf16>
    %c0_2 = arith.constant 0 : index
    %c0_3 = arith.constant 0 : index
    %4 = vector.load %arg4[%c0_2, %c0_3] : memref<128x384xbf16, #tpu.memory_space<vmem>>, vector<128x384xbf16>
    %c0_4 = arith.constant 0 : index
    %c0_5 = arith.constant 0 : index
    %5 = vector.load %arg5[%c0_4, %c0_5] : memref<1x384xf32, #tpu.memory_space<vmem>>, vector<1x384xf32>
    %c0_6 = arith.constant 0 : index
    %c0_7 = arith.constant 0 : index
    %6 = vector.load %arg6[%c0_6, %c0_7] : memref<1x384xf32, #tpu.memory_space<vmem>>, vector<1x384xf32>
    %c0_8 = arith.constant 0 : index
    %c0_9 = arith.constant 0 : index
    %7 = vector.load %arg1[%c0_8, %c0_9] : memref<8x128xbf16, #tpu.memory_space<vmem>>, vector<8x128xbf16>
    %cst = arith.constant dense<0.000000e+00> : vector<8x384xf32>
    %8 = tpu.matmul %7, %3, %cst {dimension_numbers = #tpu.dot_dimension_numbers<[1], [0], [0], [1], [0, 0, 1, 1], [], []>} : vector<8x128xbf16>, vector<128x384xbf16>, vector<8x384xf32> -> vector<8x384xf32>
    %9 = vector.broadcast %5 : vector<1x384xf32> to vector<8x384xf32>
    %10 = arith.addf %8, %9 : vector<8x384xf32>
    %c0_10 = arith.constant 0 : index
    %c0_11 = arith.constant 0 : index
    %11 = vector.load %arg10[%c0_10, %c0_11] : memref<8x384xf32, #tpu.memory_space<vmem>>, vector<8x384xf32>
    tpu.vector_store %arg10[%c0_10, %c0_11], %10 {strides = array<i32>} : memref<8x384xf32, #tpu.memory_space<vmem>>, vector<8x384xf32>,
    %c8_i32 = arith.constant 8 : i32
    %12 = arith.muli %arg0, %c8_i32 : i32
    %c0_12 = arith.constant 0 : index
    %c0_13 = arith.constant 0 : index
    %13 = vector.load %arg9[%c0_12, %c0_13] : memref<1x128xf32, #tpu.memory_space<vmem>>, vector<1x128xf32>
    %c0_i32_14 = arith.constant 0 : i32
    %c8_i32_15 = arith.constant 8 : i32
    %14 = arith.addi %c0_i32_14, %c8_i32_15 : i32
    %c1_i32 = arith.constant 1 : i32
    %15 = scf.for %arg11 = %c0_i32_14 to %14 step %c1_i32 iter_args(%arg12 = %13) -> (vector<1x128xf32>)  : i32 {
      %20 = arith.index_cast %arg11 : i32 to index
      %c0_21 = arith.constant 0 : index
      %21 = vector.load %arg10[%20, %c0_21] : memref<8x384xf32, #tpu.memory_space<vmem>>, vector<1x384xf32>
      %22 = arith.truncf %arg12 : vector<1x128xf32> to vector<1x128xbf16>
      %cst_22 = arith.constant dense<0.000000e+00> : vector<1x384xf32>
      %23 = tpu.matmul %22, %4, %cst_22 {dimension_numbers = #tpu.dot_dimension_numbers<[1], [0], [0], [1], [0, 0, 1, 1], [], []>} : vector<1x128xbf16>, vector<128x384xbf16>, vector<1x384xf32> -> vector<1x384xf32>
      %24 = arith.addf %23, %6 : vector<1x384xf32>
      %25 = vector.extract_strided_slice %21 {offsets = [0, 0], sizes = [1, 128], strides = [1, 1]} : vector<1x384xf32> to vector<1x128xf32>
      %26 = vector.extract_strided_slice %24 {offsets = [0, 0], sizes = [1, 128], strides = [1, 1]} : vector<1x384xf32> to vector<1x128xf32>
      %27 = arith.addf %25, %26 : vector<1x128xf32>
      %28 = arith.negf %27 : vector<1x128xf32>
      %29 = math.exp %28 : vector<1x128xf32>
      %cst_23 = arith.constant 1.000000e+00 : f32
      %30 = vector.broadcast %cst_23 : f32 to vector<1x128xf32>
      %31 = arith.addf %30, %29 : vector<1x128xf32>
      %32 = arith.divf %30, %31 : vector<1x128xf32>
      %33 = vector.extract_strided_slice %21 {offsets = [0, 128], sizes = [1, 128], strides = [1, 1]} : vector<1x384xf32> to vector<1x128xf32>
      %34 = vector.extract_strided_slice %24 {offsets = [0, 128], sizes = [1, 128], strides = [1, 1]} : vector<1x384xf32> to vector<1x128xf32>
      %35 = arith.addf %33, %34 : vector<1x128xf32>
      %36 = arith.negf %35 : vector<1x128xf32>
      %37 = math.exp %36 : vector<1x128xf32>
      %cst_24 = arith.constant 1.000000e+00 : f32
      %38 = vector.broadcast %cst_24 : f32 to vector<1x128xf32>
      %39 = arith.addf %38, %37 : vector<1x128xf32>
      %40 = arith.divf %38, %39 : vector<1x128xf32>
      %41 = vector.extract_strided_slice %21 {offsets = [0, 256], sizes = [1, 128], strides = [1, 1]} : vector<1x384xf32> to vector<1x128xf32>
      %42 = vector.extract_strided_slice %24 {offsets = [0, 256], sizes = [1, 128], strides = [1, 1]} : vector<1x384xf32> to vector<1x128xf32>
      %43 = arith.mulf %32, %42 : vector<1x128xf32>
      %44 = arith.addf %41, %43 : vector<1x128xf32>
      %45 = math.tanh %44 : vector<1x128xf32>
      %cst_25 = arith.constant 1.000000e+00 : f32
      %46 = vector.broadcast %cst_25 : f32 to vector<1x128xf32>
      %47 = arith.subf %46, %40 : vector<1x128xf32>
      %48 = arith.mulf %47, %45 : vector<1x128xf32>
      %49 = arith.mulf %40, %arg12 : vector<1x128xf32>
      %50 = arith.addf %48, %49 : vector<1x128xf32>
      %51 = arith.index_cast %arg11 : i32 to index
      %c0_26 = arith.constant 0 : index
      %52 = vector.load %arg7[%51, %c0_26] : memref<8x128xf32, #tpu.memory_space<vmem>>, vector<1x128xf32>
      tpu.vector_store %arg7[%51, %c0_26], %50 {strides = array<i32>} : memref<8x128xf32, #tpu.memory_space<vmem>>, vector<1x128xf32>,
      %53 = arith.addi %12, %arg11 : i32
      %c8_i32_27 = arith.constant 8 : i32
      %54 = arith.cmpi slt, %53, %c8_i32_27 : i32
      %55 = arith.select %54, %50, %arg12 : vector<1x128xf32>
      scf.yield %55 : vector<1x128xf32>
    }
    %c8_i32_16 = arith.constant 8 : i32
    %c0_17 = arith.constant 0 : index
    %c0_18 = arith.constant 0 : index
    %16 = vector.load %arg9[%c0_17, %c0_18] : memref<1x128xf32, #tpu.memory_space<vmem>>, vector<1x128xf32>
    tpu.vector_store %arg9[%c0_17, %c0_18], %15 {strides = array<i32>} : memref<1x128xf32, #tpu.memory_space<vmem>>, vector<1x128xf32>,
    %c0_i32_19 = arith.constant 0 : i32
    %17 = arith.cmpi eq, %arg0, %c0_i32_19 : i32
    %18 = arith.extui %17 : i1 to i32
    %c0_i32_20 = arith.constant 0 : i32
    %19 = arith.cmpi ne, %18, %c0_i32_20 : i32
    scf.if %19 {
      %c0_21 = arith.constant 0 : index
      %c0_22 = arith.constant 0 : index
      %20 = vector.load %arg8[%c0_21, %c0_22] : memref<1x128xf32, #tpu.memory_space<vmem>>, vector<1x128xf32>
      tpu.vector_store %arg8[%c0_21, %c0_22], %15 {strides = array<i32>} : memref<1x128xf32, #tpu.memory_space<vmem>>, vector<1x128xf32>,
    } else {
    }
    return
  }
  func.func @transform_0(%arg0: i32) -> (i32, i32) {
    %c0_i32 = arith.constant 0 : i32
    %c0_i32_0 = arith.constant 0 : i32
    return %arg0, %c0_i32 : i32, i32
  }
  func.func @transform_1(%arg0: i32) -> (i32, i32) {
    %c0_i32 = arith.constant 0 : i32
    %c0_i32_0 = arith.constant 0 : i32
    %c0_i32_1 = arith.constant 0 : i32
    return %c0_i32, %c0_i32_0 : i32, i32
  }
  func.func @transform_2(%arg0: i32) -> (i32, i32) {
    %c0_i32 = arith.constant 0 : i32
    %c0_i32_0 = arith.constant 0 : i32
    %c0_i32_1 = arith.constant 0 : i32
    return %c0_i32, %c0_i32_0 : i32, i32
  }
  func.func @transform_3(%arg0: i32) -> (i32, i32) {
    %c0_i32 = arith.constant 0 : i32
    %c0_i32_0 = arith.constant 0 : i32
    %c0_i32_1 = arith.constant 0 : i32
    return %c0_i32, %c0_i32_0 : i32, i32
  }
  func.func @transform_4(%arg0: i32) -> (i32, i32) {
    %c0_i32 = arith.constant 0 : i32
    %c0_i32_0 = arith.constant 0 : i32
    %c0_i32_1 = arith.constant 0 : i32
    return %c0_i32, %c0_i32_0 : i32, i32
  }
  func.func @transform_5(%arg0: i32) -> (i32, i32) {
    %c0_i32 = arith.constant 0 : i32
    %c0_i32_0 = arith.constant 0 : i32
    %c0_i32_1 = arith.constant 0 : i32
    return %c0_i32, %c0_i32_0 : i32, i32
  }
  func.func @transform_6(%arg0: i32) -> (i32, i32) {
    %c0_i32 = arith.constant 0 : i32
    %c0_i32_0 = arith.constant 0 : i32
    return %arg0, %c0_i32 : i32, i32
  }
  func.func @transform_7(%arg0: i32) -> (i32, i32) {
    %c0_i32 = arith.constant 0 : i32
    %c0_i32_0 = arith.constant 0 : i32
    %c0_i32_1 = arith.constant 0 : i32
    return %c0_i32, %c0_i32_0 : i32, i32
  }
}

</mosaic_0001>

<llo_original>
// kernel: tpu_custom_call.1
$region0: #{tpu_custom_call.1}
  #allocation0 [shape = 'u32[]', space=smem, size = 0x4, offset = 0x4, fixed_abs, tag = 'smem constant byte address 0x4 - core index']
  #allocation1 [shape = 'u32[144,128]{1,0:T(1,128)}', space=vmem, size = 0x12000, scoped, tag = 'internal scratch']
  #allocation2 [shape = 'f32[1,128]{1,0:T(1,128)}', space=vmem, size = 0x200, scoped, tag = 'scratch operand']
  #allocation3 [shape = 'f32[8,384]{1,0:T(8,128)}', space=vmem, size = 0x3000, scoped, tag = 'scratch operand']
  %s0 = inlined_call_operand.hbm [shape: bf16[8,128], index: 0, kind: input, shape index: {}]
  %s1 = inlined_call_operand.vmem [shape: f32[1,128], index: 1, kind: input, shape index: {}]
  %s2 = inlined_call_operand.hbm [shape: bf16[128,384], index: 2, kind: input, shape index: {}]
  %s3 = inlined_call_operand.hbm [shape: bf16[128,384], index: 3, kind: input, shape index: {}]
  %s4 = inlined_call_operand.vmem [shape: f32[1,384], index: 4, kind: input, shape index: {}]
  %s5 = inlined_call_operand.vmem [shape: f32[1,384], index: 5, kind: input, shape index: {}]
  %s6 = inlined_call_operand.hbm [shape: f32[8,128], index: 6, kind: output, shape index: {0}]
  %s7 = inlined_call_operand.hbm [shape: f32[1,128], index: 7, kind: output, shape index: {1}]
  %8 = xla_tuple %s6, %s7
  %s9 = sld [smem:[#allocation0]]
  $region69: #{tpu_custom_call.1} parent=0
    _
  %s11 = ssub.s32 1, %s9
  %s12 = scalar_select 0, %s11, %s9
  $region1: #{tpu_custom_call.1} parent=0
    #allocation4 [shape = 'u8[2048]{0}', space=vmem, size = 0x800, scoped, tag = 'input window, operand 0, single buffered']
    #allocation5 [shape = 's32[1]{0}', space=sflag, size = 0x4, scoped, tag = 'scoped memory for tpu_custom_call.1']
    #allocation6 [shape = 's32[1]{0}', space=sflag, size = 0x4, scoped, tag = 'scoped memory for tpu_custom_call.1']
    #allocation7 [shape = 'u8[98304]{0}', space=vmem, size = 0x18000, scoped, tag = 'input window, operand 2, single buffered']
    #allocation8 [shape = 's32[1]{0}', space=sflag, size = 0x4, scoped, tag = 'scoped memory for tpu_custom_call.1']
    #allocation9 [shape = 'u8[98304]{0}', space=vmem, size = 0x18000, scoped, tag = 'input window, operand 3, single buffered']
    #allocation10 [shape = 'u8[4096]{0}', space=vmem, size = 0x1000, scoped, tag = 'output window, operand 0, single buffered']
    #allocation11 [shape = 'u8[512]{0}', space=vmem, size = 0x400, scoped, tag = 'output window, operand 1, single buffered']
    #allocation12 [shape = 's32[1]{0}', space=sflag, size = 0x4, scoped, tag = 'scoped memory for tpu_custom_call.1']
    %13 = vsyncpa [#allocation5], 0
    %14 = vsyncpa [#allocation8], 0
    %15 = vsyncpa [#allocation6], 0
    %16 = vsyncpa [#allocation12], 0
    // Predicated region
    $region2: #{tpu_custom_call.1} parent=1 // pred_check
      _
    $region3: #{tpu_custom_call.1} parent=1 // pred_check_branch
      %18 = sbr.rel (0) target = $region5
    $region4: #{tpu_custom_call.1} parent=1 // pred_region
      %s20 = ssub.s32 64, 64
      %21 = vsyncadd [#allocation5], %s20
      %s23 = sshll.u32 [#allocation4], 4
      %s24 = int_to_ptr.vmem [resolvable:$true] %s23
      %26 = dma.hbm_to_vmem [thread:$0]  %s0, 64, %s24, [#allocation5]
    $region5: #{tpu_custom_call.1} parent=1 // pred_fallthru
      _
    // Predicated region
    $region6: #{tpu_custom_call.1} parent=1 // pred_check
      _
    $region7: #{tpu_custom_call.1} parent=1 // pred_check_branch
      %28 = sbr.rel (0) target = $region9
    $region8: #{tpu_custom_call.1} parent=1 // pred_region
      _
    $region9: #{tpu_custom_call.1} parent=1 // pred_fallthru
      _
    // Predicated region
    $region10: #{tpu_custom_call.1} parent=1 // pred_check
      _
    $region11: #{tpu_custom_call.1} parent=1 // pred_check_branch
      %30 = sbr.rel (0) target = $region13
    $region12: #{tpu_custom_call.1} parent=1 // pred_region
      %s32 = ssub.s32 3072, 3072
      %33 = vsyncadd [#allocation8], %s32
      %s34 = sshll.u32 [#allocation7], 4
      %s35 = int_to_ptr.vmem [resolvable:$true] %s34
      %40 = dma.hbm_to_vmem [thread:$0]  %s2, 3072, %s35, [#allocation8], 192, 192, 12
    $region13: #{tpu_custom_call.1} parent=1 // pred_fallthru
      _
    // Predicated region
    $region14: #{tpu_custom_call.1} parent=1 // pred_check
      _
    $region15: #{tpu_custom_call.1} parent=1 // pred_check_branch
      %42 = sbr.rel (0) target = $region17
    $region16: #{tpu_custom_call.1} parent=1 // pred_region
      %s44 = ssub.s32 3072, 3072
      %45 = vsyncadd [#allocation8], %s44
      %s46 = sshll.u32 [#allocation9], 4
      %s47 = int_to_ptr.vmem [resolvable:$true] %s46
      %52 = dma.hbm_to_vmem [thread:$0]  %s3, 3072, %s47, [#allocation8], 192, 192, 12
    $region17: #{tpu_custom_call.1} parent=1 // pred_fallthru
      _
    // Predicated region
    $region18: #{tpu_custom_call.1} parent=1 // pred_check
      _
    $region19: #{tpu_custom_call.1} parent=1 // pred_check_branch
      %54 = sbr.rel (0) target = $region21
    $region20: #{tpu_custom_call.1} parent=1 // pred_region
      _
    $region21: #{tpu_custom_call.1} parent=1 // pred_fallthru
      _
    // Predicated region
    $region22: #{tpu_custom_call.1} parent=1 // pred_check
      _
    $region23: #{tpu_custom_call.1} parent=1 // pred_check_branch
      %56 = sbr.rel (0) target = $region25
    $region24: #{tpu_custom_call.1} parent=1 // pred_region
      _
    $region25: #{tpu_custom_call.1} parent=1 // pred_fallthru
      _
    // Predicated region
    $region26: #{tpu_custom_call.1} parent=1 // pred_check
      _
    $region27: #{tpu_custom_call.1} parent=1 // pred_check_branch
      %58 = sbr.rel (0) target = $region29
    $region28: #{tpu_custom_call.1} parent=1 // pred_region
      %59 = dma.done [#allocation5], 64
    $region29: #{tpu_custom_call.1} parent=1 // pred_fallthru
      _
    // Predicated region
    $region30: #{tpu_custom_call.1} parent=1 // pred_check
      _
    $region31: #{tpu_custom_call.1} parent=1 // pred_check_branch
      %61 = sbr.rel (0) target = $region33
    $region32: #{tpu_custom_call.1} parent=1 // pred_region
      %62 = dma.done [#allocation8], 3072
    $region33: #{tpu_custom_call.1} parent=1 // pred_fallthru
      _
    // Predicated region
    $region34: #{tpu_custom_call.1} parent=1 // pred_check
      _
    $region35: #{tpu_custom_call.1} parent=1 // pred_check_branch
      %64 = sbr.rel (0) target = $region37
    $region36: #{tpu_custom_call.1} parent=1 // pred_region
      %65 = dma.done [#allocation8], 3072
    $region37: #{tpu_custom_call.1} parent=1 // pred_fallthru
      _
    %p67 = scmp.eq.s32.totalorder 0, 0
    // Predicated region
    $region38: #{tpu_custom_call.1} parent=1 // pred_check
      %p68 = pneg %p67
    $region39: #{tpu_custom_call.1} parent=1 // pred_check_branch
      %70 = sbr.rel (%p68) target = $region41
    $region40: #{tpu_custom_call.1} parent=1 // pred_region
      %v71 = vld [vmem:[%s1] sm:$0x1]
      %72 = vst [vmem:[#allocation2] sm:$0x1] %v71
    $region41: #{tpu_custom_call.1} parent=1 // pred_fallthru
      _
    %v73 = vld [vmem:[#allocation7] sm:$0xff]
    %v74 = vld [vmem:[#allocation7 + $0x8] sm:$0xf]
    %v75 = vld [vmem:[#allocation7 + $0xc] sm:$0xff]
    %v76 = vld [vmem:[#allocation7 + $0x14] sm:$0xf]
    %v77 = vld [vmem:[#allocation7 + $0x18] sm:$0xff]
    %v78 = vld [vmem:[#allocation7 + $0x20] sm:$0xf]
    %v79 = vld [vmem:[#allocation7 + $0x24] sm:$0xff]
    %v80 = vld [vmem:[#allocation7 + $0x2c] sm:$0xf]
    %v81 = vld [vmem:[#allocation7 + $0x30] sm:$0xff]
    %v82 = vld [vmem:[#allocation7 + $0x38] sm:$0xf]
    %v83 = vld [vmem:[#allocation7 + $0x3c] sm:$0xff]
    %v84 = vld [vmem:[#allocation7 + $0x44] sm:$0xf]
    %v85 = vld [vmem:[#allocation7 + $0x48] sm:$0xff]
    %v86 = vld [vmem:[#allocation7 + $0x50] sm:$0xf]
    %v87 = vld [vmem:[#allocation7 + $0x54] sm:$0xff]
    %v88 = vld [vmem:[#allocation7 + $0x5c] sm:$0xf]
    %v89 = vld [vmem:[#allocation7 + $0x60] sm:$0xff]
    %v90 = vld [vmem:[#allocation7 + $0x68] sm:$0xf]
    %v91 = vld [vmem:[#allocation7 + $0x6c] sm:$0xff]
    %v92 = vld [vmem:[#allocation7 + $0x74] sm:$0xf]
    %v93 = vld [vmem:[#allocation7 + $0x78] sm:$0xff]
    %v94 = vld [vmem:[#allocation7 + $0x80] sm:$0xf]
    %v95 = vld [vmem:[#allocation7 + $0x84] sm:$0xff]
    %v96 = vld [vmem:[#allocation7 + $0x8c] sm:$0xf]
    %v97 = vld [vmem:[#allocation7 + $0x90] sm:$0xff]
    %v98 = vld [vmem:[#allocation7 + $0x98] sm:$0xf]
    %v99 = vld [vmem:[#allocation7 + $0x9c] sm:$0xff]
    %v100 = vld [vmem:[#allocation7 + $0xa4] sm:$0xf]
    %v101 = vld [vmem:[#allocation7 + $0xa8] sm:$0xff]
    %v102 = vld [vmem:[#allocation7 + $0xb0] sm:$0xf]
    %v103 = vld [vmem:[#allocation7 + $0xb4] sm:$0xff]
    %v104 = vld [vmem:[#allocation7 + $0xbc] sm:$0xf]
    %v105 = vld [vmem:[#allocation9] sm:$0xff]
    %v106 = vld [vmem:[#allocation9 + $0x8] sm:$0xf]
    %v107 = vld [vmem:[#allocation9 + $0xc] sm:$0xff]
    %v108 = vld [vmem:[#allocation9 + $0x14] sm:$0xf]
    %v109 = vld [vmem:[#allocation9 + $0x18] sm:$0xff]
    %v110 = vld [vmem:[#allocation9 + $0x20] sm:$0xf]
    %v111 = vld [vmem:[#allocation9 + $0x24] sm:$0xff]
    %v112 = vld [vmem:[#allocation9 + $0x2c] sm:$0xf]
    %v113 = vld [vmem:[#allocation9 + $0x30] sm:$0xff]
    %v114 = vld [vmem:[#allocation9 + $0x38] sm:$0xf]
    %v115 = vld [vmem:[#allocation9 + $0x3c] sm:$0xff]
    %v116 = vld [vmem:[#allocation9 + $0x44] sm:$0xf]
    %v117 = vld [vmem:[#allocation9 + $0x48] sm:$0xff]
    %v118 = vld [vmem:[#allocation9 + $0x50] sm:$0xf]
    %v119 = vld [vmem:[#allocation9 + $0x54] sm:$0xff]
    %v120 = vld [vmem:[#allocation9 + $0x5c] sm:$0xf]
    %v121 = vld [vmem:[#allocation9 + $0x60] sm:$0xff]
    %v122 = vld [vmem:[#allocation9 + $0x68] sm:$0xf]
    %v123 = vld [vmem:[#allocation9 + $0x6c] sm:$0xff]
    %v124 = vld [vmem:[#allocation9 + $0x74] sm:$0xf]
    %v125 = vld [vmem:[#allocation9 + $0x78] sm:$0xff]
    %v126 = vld [vmem:[#allocation9 + $0x80] sm:$0xf]
    %v127 = vld [vmem:[#allocation9 + $0x84] sm:$0xff]
    %v128 = vld [vmem:[#allocation9 + $0x8c] sm:$0xf]
    %v129 = vld [vmem:[#allocation9 + $0x90] sm:$0xff]
    %v130 = vld [vmem:[#allocation9 + $0x98] sm:$0xf]
    %v131 = vld [vmem:[#allocation9 + $0x9c] sm:$0xff]
    %v132 = vld [vmem:[#allocation9 + $0xa4] sm:$0xf]
    %v133 = vld [vmem:[#allocation9 + $0xa8] sm:$0xff]
    %v134 = vld [vmem:[#allocation9 + $0xb0] sm:$0xf]
    %v135 = vld [vmem:[#allocation9 + $0xb4] sm:$0xff]
    %v136 = vld [vmem:[#allocation9 + $0xbc] sm:$0xf]
    %v137 = vld [vmem:[%s4] sm:$0x7]
    %v138 = vld [vmem:[%s5] sm:$0x7]
    %v139 = vld [vmem:[#allocation4] sm:$0xf]
    %v141 = vlaneseq
    %v142 = vshrl.u32 %v141, 7
    %v143 = vsub.s32 0, %v142
    %v144 = vrot.slane %v137, %v143
    %v145 = vlaneseq
    %v146 = vshrl.u32 %v145, 7
    %v147 = vsub.s32 1, %v146
    %v148 = vrot.slane %v137, %v147
    %v149 = vlaneseq
    %v150 = vshrl.u32 %v149, 7
    %v151 = vsub.s32 2, %v150
    %v152 = vrot.slane %v137, %v151
    %v188 = vunpack.c.l.b16 %v73
    %v189 = vunpack.c.h.b16 %v73
    %v190 = vunpack.c.l.b16 %v74
    %v191 = vunpack.c.l.b16 %v75
    %v192 = vunpack.c.h.b16 %v75
    %v193 = vunpack.c.l.b16 %v76
    %v194 = vunpack.c.l.b16 %v77
    %v195 = vunpack.c.h.b16 %v77
    %v196 = vunpack.c.l.b16 %v78
    %v197 = vunpack.c.l.b16 %v79
    %v198 = vunpack.c.h.b16 %v79
    %v199 = vunpack.c.l.b16 %v80
    %v200 = vunpack.c.l.b16 %v81
    %v201 = vunpack.c.h.b16 %v81
    %v202 = vunpack.c.l.b16 %v82
    %v203 = vunpack.c.l.b16 %v83
    %v204 = vunpack.c.h.b16 %v83
    %v205 = vunpack.c.l.b16 %v84
    %v206 = vunpack.c.l.b16 %v85
    %v207 = vunpack.c.h.b16 %v85
    %v208 = vunpack.c.l.b16 %v86
    %v209 = vunpack.c.l.b16 %v87
    %v210 = vunpack.c.h.b16 %v87
    %v211 = vunpack.c.l.b16 %v88
    %v212 = vunpack.c.l.b16 %v89
    %v213 = vunpack.c.h.b16 %v89
    %v214 = vunpack.c.l.b16 %v90
    %v215 = vunpack.c.l.b16 %v91
    %v216 = vunpack.c.h.b16 %v91
    %v217 = vunpack.c.l.b16 %v92
    %v218 = vunpack.c.l.b16 %v93
    %v219 = vunpack.c.h.b16 %v93
    %v220 = vunpack.c.l.b16 %v94
    %v221 = vunpack.c.l.b16 %v95
    %v222 = vunpack.c.h.b16 %v95
    %v223 = vunpack.c.l.b16 %v96
    %v224 = vunpack.c.l.b16 %v97
    %v225 = vunpack.c.h.b16 %v97
    %v226 = vunpack.c.l.b16 %v98
    %v227 = vunpack.c.l.b16 %v99
    %v228 = vunpack.c.h.b16 %v99
    %v229 = vunpack.c.l.b16 %v100
    %v230 = vunpack.c.l.b16 %v101
    %v231 = vunpack.c.h.b16 %v101
    %v232 = vunpack.c.l.b16 %v102
    %v233 = vunpack.c.l.b16 %v103
    %v234 = vunpack.c.h.b16 %v103
    %v235 = vunpack.c.l.b16 %v104
    %v236 = vpack.c.b16 %v191, %v188
    %v237 = vpack.c.b16 %v192, %v189
    %v238 = vpack.c.b16 %v193, %v190
    %v239 = vpack.c.b16 %v197, %v194
    %v240 = vpack.c.b16 %v198, %v195
    %v241 = vpack.c.b16 %v199, %v196
    %v242 = vpack.c.b16 %v203, %v200
    %v243 = vpack.c.b16 %v204, %v201
    %v244 = vpack.c.b16 %v205, %v202
    %v245 = vpack.c.b16 %v209, %v206
    %v246 = vpack.c.b16 %v210, %v207
    %v247 = vpack.c.b16 %v211, %v208
    %v248 = vpack.c.b16 %v215, %v212
    %v249 = vpack.c.b16 %v216, %v213
    %v250 = vpack.c.b16 %v217, %v214
    %v251 = vpack.c.b16 %v221, %v218
    %v252 = vpack.c.b16 %v222, %v219
    %v253 = vpack.c.b16 %v223, %v220
    %v254 = vpack.c.b16 %v227, %v224
    %v255 = vpack.c.b16 %v228, %v225
    %v256 = vpack.c.b16 %v229, %v226
    %v257 = vpack.c.b16 %v233, %v230
    %v258 = vpack.c.b16 %v234, %v231
    %v259 = vpack.c.b16 %v235, %v232
    %284 = vmatprep.subr.bf16.mxu0 %v258
    %285 = vmatpush1.bf16.msra.mxu0 %v257
    %286 = vmatprep.subr.bf16.mxu0 %v255
    %287 = vmatpush1.bf16.msra.mxu0 %v254
    %288 = vmatprep.subr.bf16.mxu0 %v252
    %289 = vmatpush1.bf16.msra.mxu0 %v251
    %290 = vmatprep.subr.bf16.mxu0 %v249
    %291 = vmatpush1.bf16.msra.mxu0 %v248
    %292 = vmatprep.subr.bf16.mxu0 %v246
    %293 = vmatpush1.bf16.msra.mxu0 %v245
    %294 = vmatprep.subr.bf16.mxu0 %v243
    %295 = vmatpush1.bf16.msra.mxu0 %v242
    %296 = vmatprep.subr.bf16.mxu0 %v240
    %297 = vmatpush1.bf16.msra.mxu0 %v239
    %298 = vmatprep.subr.bf16.mxu0 %v237
    %299 = vmatpush1.bf16.msra.mxu0 %v236
    %300 = vmatprep.subr.bf16.mxu0 0
    %301 = vmatpush2.bf16.msra.mxu0 0
    %302 = vmatprep.subr.bf16.mxu0 0
    %303 = vmatpush2.bf16.msra.mxu0 0
    %304 = vmatprep.subr.bf16.mxu0 0
    %305 = vmatpush2.bf16.msra.mxu0 0
    %306 = vmatprep.subr.bf16.mxu0 0
    %307 = vmatpush2.bf16.msra.mxu0 0
    %308 = vmatprep.subr.bf16.mxu0 0
    %309 = vmatpush2.bf16.msra.mxu0 0
    %310 = vmatprep.subr.bf16.mxu0 0
    %311 = vmatpush2.bf16.msra.mxu0 0
    %312 = vmatprep.subr.bf16.mxu0 0
    %313 = vmatpush2.bf16.msra.mxu0 0
    %314 = vmatprep.subr.bf16.mxu0 0
    %315 = vmatpush2.bf16.msra.mxu0 0
    %316 = vmatprep.mubr.bf16.mxu0 0
    %317 = vmatmul.mubr.bf16.gmra.mxu0 %v139
    %v318 = vpop.f32.mrf.mxu0
    %v319 = vadd.f32 %v144, %v318
    %v320 = vpop.f32.mrf.mxu0
    %v321 = vadd.f32 %v148, %v320
    %v322 = vpop.f32.mrf.mxu0
    %v323 = vpop.f32.mrf.mxu0
    %324 = vdwg.mxu0
    %325 = vmatprep.subr.bf16.mxu0 0
    %326 = vmatpush1.bf16.msra.mxu0 %v259
    %327 = vmatprep.subr.bf16.mxu0 0
    %328 = vmatpush1.bf16.msra.mxu0 %v256
    %329 = vmatprep.subr.bf16.mxu0 0
    %330 = vmatpush1.bf16.msra.mxu0 %v253
    %331 = vmatprep.subr.bf16.mxu0 0
    %332 = vmatpush1.bf16.msra.mxu0 %v250
    %333 = vmatprep.subr.bf16.mxu0 0
    %334 = vmatpush1.bf16.msra.mxu0 %v247
    %335 = vmatprep.subr.bf16.mxu0 0
    %336 = vmatpush1.bf16.msra.mxu0 %v244
    %337 = vmatprep.subr.bf16.mxu0 0
    %338 = vmatpush1.bf16.msra.mxu0 %v241
    %339 = vmatprep.subr.bf16.mxu0 0
    %340 = vmatpush1.bf16.msra.mxu0 %v238
    %341 = vmatprep.subr.bf16.mxu0 0
    %342 = vmatpush2.bf16.msra.mxu0 0
    %343 = vmatprep.subr.bf16.mxu0 0
    %344 = vmatpush2.bf16.msra.mxu0 0
    %345 = vmatprep.subr.bf16.mxu0 0
    %346 = vmatpush2.bf16.msra.mxu0 0
    %347 = vmatprep.subr.bf16.mxu0 0
    %348 = vmatpush2.bf16.msra.mxu0 0
    %349 = vmatprep.subr.bf16.mxu0 0
    %350 = vmatpush2.bf16.msra.mxu0 0
    %351 = vmatprep.subr.bf16.mxu0 0
    %352 = vmatpush2.bf16.msra.mxu0 0
    %353 = vmatprep.subr.bf16.mxu0 0
    %354 = vmatpush2.bf16.msra.mxu0 0
    %355 = vmatprep.subr.bf16.mxu0 0
    %356 = vmatpush2.bf16.msra.mxu0 0
    %357 = vmatprep.mubr.bf16.mxu0 0
    %358 = vmatmul.mubr.bf16.gmra.mxu0 %v139
    %v359 = vpop.f32.mrf.mxu0
    %v360 = vadd.f32 %v152, %v359
    %v361 = vpop.f32.mrf.mxu0
    %v362 = vpop.f32.mrf.mxu0
    %v363 = vpop.f32.mrf.mxu0
    %364 = vdwg.mxu0
    %365 = vst [vmem:[#allocation3] sm:$0xff] %v319
    %366 = vst [vmem:[#allocation3 + $0x8] sm:$0xff] %v321
    %367 = vst [vmem:[#allocation3 + $0x10] sm:$0xff] %v360
    %s368 = smul.u32 0, 8
    %v369 = vld [vmem:[#allocation2] sm:$0x1]
    loop: start=0, step=1, limit=8
    $region42: #{tpu_custom_call.1} parent=1 // loop_pre_header
      _
    $region43: #{tpu_custom_call.1} parent=1 // loop_header
      %s371 = sphi 0, %s375
      %p372 = scmp.ge.s32.totalorder %s371, 8
      %v376 = vphi %v369, %v645
    $region44: #{tpu_custom_call.1} parent=1 // loop_header_branch
      %374 = sbr.rel (%p372) target = $region48
    $region45: #{tpu_custom_call.1} parent=1 // loop_body
      %s377 = sshra.s32 %s371, 3
      %s378 = sand.u32 %s371, 7
      %s379 = sshra.s32 %s371, 3
      %s380 = sand.u32 %s371, 7
      %s381 = smul.u32 %s377, 3
      %s382 = smul.u32 %s381, 8
      %s383 = sadd.s32 %s382, %s380
      %s384 = scalar_lea.vmem [#allocation3], %s383
      %v385 = vld [vmem:[%s384] ss:$8 sm:$0x7]
      %v386 = vpack.c.bf16 %v376, %v376
      %v419 = vunpack.c.l.b16 %v105
      %v420 = vunpack.c.h.b16 %v105
      %v421 = vunpack.c.l.b16 %v106
      %v422 = vunpack.c.l.b16 %v107
      %v423 = vunpack.c.h.b16 %v107
      %v424 = vunpack.c.l.b16 %v108
      %v425 = vunpack.c.l.b16 %v109
      %v426 = vunpack.c.h.b16 %v109
      %v427 = vunpack.c.l.b16 %v110
      %v428 = vunpack.c.l.b16 %v111
      %v429 = vunpack.c.h.b16 %v111
      %v430 = vunpack.c.l.b16 %v112
      %v431 = vunpack.c.l.b16 %v113
      %v432 = vunpack.c.h.b16 %v113
      %v433 = vunpack.c.l.b16 %v114
      %v434 = vunpack.c.l.b16 %v115
      %v435 = vunpack.c.h.b16 %v115
      %v436 = vunpack.c.l.b16 %v116
      %v437 = vunpack.c.l.b16 %v117
      %v438 = vunpack.c.h.b16 %v117
      %v439 = vunpack.c.l.b16 %v118
      %v440 = vunpack.c.l.b16 %v119
      %v441 = vunpack.c.h.b16 %v119
      %v442 = vunpack.c.l.b16 %v120
      %v443 = vunpack.c.l.b16 %v121
      %v444 = vunpack.c.h.b16 %v121
      %v445 = vunpack.c.l.b16 %v122
      %v446 = vunpack.c.l.b16 %v123
      %v447 = vunpack.c.h.b16 %v123
      %v448 = vunpack.c.l.b16 %v124
      %v449 = vunpack.c.l.b16 %v125
      %v450 = vunpack.c.h.b16 %v125
      %v451 = vunpack.c.l.b16 %v126
      %v452 = vunpack.c.l.b16 %v127
      %v453 = vunpack.c.h.b16 %v127
      %v454 = vunpack.c.l.b16 %v128
      %v455 = vunpack.c.l.b16 %v129
      %v456 = vunpack.c.h.b16 %v129
      %v457 = vunpack.c.l.b16 %v130
      %v458 = vunpack.c.l.b16 %v131
      %v459 = vunpack.c.h.b16 %v131
      %v460 = vunpack.c.l.b16 %v132
      %v461 = vunpack.c.l.b16 %v133
      %v462 = vunpack.c.h.b16 %v133
      %v463 = vunpack.c.l.b16 %v134
      %v464 = vunpack.c.l.b16 %v135
      %v465 = vunpack.c.h.b16 %v135
      %v466 = vunpack.c.l.b16 %v136
      %v467 = vpack.c.b16 %v422, %v419
      %v468 = vpack.c.b16 %v423, %v420
      %v469 = vpack.c.b16 %v424, %v421
      %v470 = vpack.c.b16 %v428, %v425
      %v471 = vpack.c.b16 %v429, %v426
      %v472 = vpack.c.b16 %v430, %v427
      %v473 = vpack.c.b16 %v434, %v431
      %v474 = vpack.c.b16 %v435, %v432
      %v475 = vpack.c.b16 %v436, %v433
      %v476 = vpack.c.b16 %v440, %v437
      %v477 = vpack.c.b16 %v441, %v438
      %v478 = vpack.c.b16 %v442, %v439
      %v479 = vpack.c.b16 %v446, %v443
      %v480 = vpack.c.b16 %v447, %v444
      %v481 = vpack.c.b16 %v448, %v445
      %v482 = vpack.c.b16 %v452, %v449
      %v483 = vpack.c.b16 %v453, %v450
      %v484 = vpack.c.b16 %v454, %v451
      %v485 = vpack.c.b16 %v458, %v455
      %v486 = vpack.c.b16 %v459, %v456
      %v487 = vpack.c.b16 %v460, %v457
      %v488 = vpack.c.b16 %v464, %v461
      %v489 = vpack.c.b16 %v465, %v462
      %v490 = vpack.c.b16 %v466, %v463
      %v516 = vlaneseq
      %v517 = vshrl.u32 %v516, 7
      %v518 = vsub.s32 0, %v517
      %v519 = vrot.slane %v138, %v518
      %v520 = vlaneseq
      %v521 = vshrl.u32 %v520, 7
      %v522 = vsub.s32 1, %v521
      %v523 = vrot.slane %v138, %v522
      %v524 = vlaneseq
      %v525 = vshrl.u32 %v524, 7
      %v526 = vsub.s32 2, %v525
      %v527 = vrot.slane %v138, %v526
      %531 = vmatprep.subr.bf16.mxu0 %v489
      %532 = vmatpush1.bf16.msra.mxu0 %v488
      %533 = vmatprep.subr.bf16.mxu0 %v486
      %534 = vmatpush1.bf16.msra.mxu0 %v485
      %535 = vmatprep.subr.bf16.mxu0 %v483
      %536 = vmatpush1.bf16.msra.mxu0 %v482
      %537 = vmatprep.subr.bf16.mxu0 %v480
      %538 = vmatpush1.bf16.msra.mxu0 %v479
      %539 = vmatprep.subr.bf16.mxu0 %v477
      %540 = vmatpush1.bf16.msra.mxu0 %v476
      %541 = vmatprep.subr.bf16.mxu0 %v474
      %542 = vmatpush1.bf16.msra.mxu0 %v473
      %543 = vmatprep.subr.bf16.mxu0 %v471
      %544 = vmatpush1.bf16.msra.mxu0 %v470
      %545 = vmatprep.subr.bf16.mxu0 %v468
      %546 = vmatpush1.bf16.msra.mxu0 %v467
      %547 = vmatprep.subr.bf16.mxu0 0
      %548 = vmatpush2.bf16.msra.mxu0 0
      %549 = vmatprep.subr.bf16.mxu0 0
      %550 = vmatpush2.bf16.msra.mxu0 0
      %551 = vmatprep.subr.bf16.mxu0 0
      %552 = vmatpush2.bf16.msra.mxu0 0
      %553 = vmatprep.subr.bf16.mxu0 0
      %554 = vmatpush2.bf16.msra.mxu0 0
      %555 = vmatprep.subr.bf16.mxu0 0
      %556 = vmatpush2.bf16.msra.mxu0 0
      %557 = vmatprep.subr.bf16.mxu0 0
      %558 = vmatpush2.bf16.msra.mxu0 0
      %559 = vmatprep.subr.bf16.mxu0 0
      %560 = vmatpush2.bf16.msra.mxu0 0
      %561 = vmatprep.subr.bf16.mxu0 0
      %562 = vmatpush2.bf16.msra.mxu0 0
      %563 = vmatprep.mubr.bf16.mxu0 0
      %564 = vmatmul.mubr.bf16.gmra.mxu0 %v386
      %v565 = vpop.f32.mrf.mxu0
      %v566 = vadd.f32 %v519, %v565
      %v567 = vpop.f32.mrf.mxu0
      %v568 = vadd.f32 %v523, %v567
      %v569 = vpop.f32.mrf.mxu0
      %v570 = vpop.f32.mrf.mxu0
      %571 = vdwg.mxu0
      %572 = vmatprep.subr.bf16.mxu0 0
      %573 = vmatpush1.bf16.msra.mxu0 %v490
      %574 = vmatprep.subr.bf16.mxu0 0
      %575 = vmatpush1.bf16.msra.mxu0 %v487
      %576 = vmatprep.subr.bf16.mxu0 0
      %577 = vmatpush1.bf16.msra.mxu0 %v484
      %578 = vmatprep.subr.bf16.mxu0 0
      %579 = vmatpush1.bf16.msra.mxu0 %v481
      %580 = vmatprep.subr.bf16.mxu0 0
      %581 = vmatpush1.bf16.msra.mxu0 %v478
      %582 = vmatprep.subr.bf16.mxu0 0
      %583 = vmatpush1.bf16.msra.mxu0 %v475
      %584 = vmatprep.subr.bf16.mxu0 0
      %585 = vmatpush1.bf16.msra.mxu0 %v472
      %586 = vmatprep.subr.bf16.mxu0 0
      %587 = vmatpush1.bf16.msra.mxu0 %v469
      %588 = vmatprep.subr.bf16.mxu0 0
      %589 = vmatpush2.bf16.msra.mxu0 0
      %590 = vmatprep.subr.bf16.mxu0 0
      %591 = vmatpush2.bf16.msra.mxu0 0
      %592 = vmatprep.subr.bf16.mxu0 0
      %593 = vmatpush2.bf16.msra.mxu0 0
      %594 = vmatprep.subr.bf16.mxu0 0
      %595 = vmatpush2.bf16.msra.mxu0 0
      %596 = vmatprep.subr.bf16.mxu0 0
      %597 = vmatpush2.bf16.msra.mxu0 0
      %598 = vmatprep.subr.bf16.mxu0 0
      %599 = vmatpush2.bf16.msra.mxu0 0
      %600 = vmatprep.subr.bf16.mxu0 0
      %601 = vmatpush2.bf16.msra.mxu0 0
      %602 = vmatprep.subr.bf16.mxu0 0
      %603 = vmatpush2.bf16.msra.mxu0 0
      %604 = vmatprep.mubr.bf16.mxu0 0
      %605 = vmatmul.mubr.bf16.gmra.mxu0 %v386
      %v606 = vpop.f32.mrf.mxu0
      %v607 = vadd.f32 %v527, %v606
      %v608 = vpop.f32.mrf.mxu0
      %v609 = vpop.f32.mrf.mxu0
      %v610 = vpop.f32.mrf.mxu0
      %611 = vdwg.mxu0
      %v612 = vadd.f32 %v385, %v566
      %v613 = vxor.u32 %v612, 2147483648
      %v614 = vmul.f32 %v613, 1.442695
      %v615 = vpow.pop %v614
      %v616 = vadd.f32 %v615, 1.0
      %v617 = vrcp.pop %v616
      %v618 = vmul.f32 1.0, %v617
      %v620 = vrot.slane %v385, 1
      %v622 = vadd.f32 %v620, %v568
      %v623 = vxor.u32 %v622, 2147483648
      %v624 = vmul.f32 %v623, 1.442695
      %v625 = vpow.pop %v624
      %v626 = vadd.f32 %v625, 1.0
      %v627 = vrcp.pop %v626
      %v628 = vmul.f32 1.0, %v627
      %v629 = vmul.f32 %v618, %v607
      %v630 = vrot.slane %v385, 2
      %v632 = vadd.f32 %v630, %v629
      %v633 = vtanh.pop %v632
      %v634 = vsub.f32 1.0, %v628
      %v635 = vmul.f32 %v634, %v633
      %v636 = vmul.f32 %v628, %v376
      %v637 = vadd.f32 %v635, %v636
      %s638 = scalar_lea.vmem [#allocation10], %s371
      %639 = vst [vmem:[%s638] sm:$0x1] %v637
      %s640 = sadd.s32 %s368, %s371
      %p641 = scmp.lt.s32.totalorder %s640, 8
      %s642 = scalar_select %p641, 1, 0
      %v643 = vstv %s642
      %vm644 = vcmp.eq.s32.totalorder %v643, 1
      %v645 = vsel %vm644, %v637, %v376
    $region46: #{tpu_custom_call.1} parent=1 // loop_footer
      %s375 = sadd.s32 1, %s371
    $region47: #{tpu_custom_call.1} parent=1 // loop_footer_branch
      %370 = sbr.rel target = $region43
    $region48: #{tpu_custom_call.1} parent=1 // loop_exit
      _
    %646 = vst [vmem:[#allocation2] sm:$0x1] %v376
    // Predicated region
    $region49: #{tpu_custom_call.1} parent=1 // pred_check
      %p647 = pneg %p67
    $region50: #{tpu_custom_call.1} parent=1 // pred_check_branch
      %649 = sbr.rel (%p647) target = $region52
    $region51: #{tpu_custom_call.1} parent=1 // pred_region
      %650 = vst [vmem:[#allocation11] sm:$0x1] %v376
    $region52: #{tpu_custom_call.1} parent=1 // pred_fallthru
      _
    // Predicated region
    $region53: #{tpu_custom_call.1} parent=1 // pred_check
      _
    $region54: #{tpu_custom_call.1} parent=1 // pred_check_branch
      %652 = sbr.rel (0) target = $region56
    $region55: #{tpu_custom_call.1} parent=1 // pred_region
      %s654 = ssub.s32 128, 128
      %655 = vsyncadd [#allocation6], %s654
      %s657 = sshll.u32 [#allocation10], 4
      %s658 = int_to_ptr.vmem [resolvable:$true] %s657
      %660 = dma.vmem_to_hbm [thread:$0]  %s658, 128, %s6, [#allocation6]
    $region56: #{tpu_custom_call.1} parent=1 // pred_fallthru
      _
    // Predicated region
    $region57: #{tpu_custom_call.1} parent=1 // pred_check
      _
    $region58: #{tpu_custom_call.1} parent=1 // pred_check_branch
      %662 = sbr.rel (0) target = $region60
    $region59: #{tpu_custom_call.1} parent=1 // pred_region
      %s664 = ssub.s32 16, 16
      %665 = vsyncadd [#allocation12], %s664
      %s667 = sshll.u32 [#allocation11], 4
      %s668 = int_to_ptr.vmem [resolvable:$true] %s667
      %670 = dma.vmem_to_hbm [thread:$0]  %s668, 16, %s7, [#allocation12]
    $region60: #{tpu_custom_call.1} parent=1 // pred_fallthru
      _
    // Predicated region
    $region61: #{tpu_custom_call.1} parent=1 // pred_check
      _
    $region62: #{tpu_custom_call.1} parent=1 // pred_check_branch
      %672 = sbr.rel (0) target = $region64
    $region63: #{tpu_custom_call.1} parent=1 // pred_region
      %673 = dma.done [#allocation6], 128
    $region64: #{tpu_custom_call.1} parent=1 // pred_fallthru
      _
    // Predicated region
    $region65: #{tpu_custom_call.1} parent=1 // pred_check
      _
    $region66: #{tpu_custom_call.1} parent=1 // pred_check_branch
      %675 = sbr.rel (0) target = $region68
    $region67: #{tpu_custom_call.1} parent=1 // pred_region
      %676 = dma.done [#allocation12], 16
    $region68: #{tpu_custom_call.1} parent=1 // pred_fallthru
      _
    %677 = vsyncpa [#allocation5], 1
    %678 = vsyncpa [#allocation8], 1
    %679 = vsyncpa [#allocation6], 1
    %680 = vsyncpa [#allocation12], 1

</llo_original>
